<compile_context>
chip_gen: v7x
topology: tpu7x:2x2x1
jax: 0.10.0
libtpu: 0.0.40
codegen_flags: <defaults>
</compile_context>

<pallas_src>
import functools

import jax
import jax.numpy as jnp
from jax.experimental import pallas as pl
from jax.experimental.pallas import tpu as pltpu

_LANE = 128
_SUBLANE = 8


def _round_up(x, m):
    return ((x + m - 1) // m) * m


def _choose_tile_b(batch):
    """One step for small/medium batches; 256-512-row tiles for big ones."""
    if batch <= 512:
        return batch
    for t in (512, 448, 384, 320, 256):
        if batch % t == 0:
            return t
    return 256  # ragged tail -> batch zero-padded (see vae_forward)


# --------------------------------------------------------------------------
# One-time parameter packing (NOT in the per-call hot path).
# --------------------------------------------------------------------------
def pack_params(params, compute_dtype=jnp.bfloat16):
    """Fuse mu/log_sigma heads, 128-lane pad all feature dims, cast weights.

    Returns ((w_enc, b_enc, w_head, b_head, w_dec, b_dec), dims).
    Weight layout:
      w_enc : [d_in, enc_out_p]              (compute dtype)
      w_head: [enc_out_p, 2*latent_p]        = [ Wmu|0pad  |  Wls|0pad ]
      w_dec : [latent_p, d_out_p]            (K rows beyond latent are zero)
    Biases stay f32 (added to f32 accumulators).
    """
    (w_enc, b_enc, w_mu, b_mu, w_ls, b_ls, w_dec, b_dec) = params
    d_in, enc_out = w_enc.shape
    latent = w_mu.shape[1]
    d_out = w_dec.shape[1]

    enc_out_p = _round_up(enc_out, _LANE)
    latent_p = _round_up(latent, _LANE)
    d_out_p = _round_up(d_out, _LANE)
    cd = compute_dtype

    w_enc_p = jnp.pad(w_enc, ((0, 0), (0, enc_out_p - enc_out))).astype(cd)
    b_enc_p = jnp.pad(b_enc, ((0, 0), (0, enc_out_p - enc_out)))

    def _pad_head_w(w):  # [enc_out, latent] -> [enc_out_p, latent_p]
        return jnp.pad(w, ((0, enc_out_p - enc_out), (0, latent_p - latent)))

    def _pad_head_b(b):  # [1, latent] -> [1, latent_p]
        return jnp.pad(b, ((0, 0), (0, latent_p - latent)))

    w_head = jnp.concatenate([_pad_head_w(w_mu), _pad_head_w(w_ls)],
                             axis=1).astype(cd)
    b_head = jnp.concatenate([_pad_head_b(b_mu), _pad_head_b(b_ls)], axis=1)

    w_dec_p = jnp.pad(w_dec, ((0, latent_p - latent),
                              (0, d_out_p - d_out))).astype(cd)
    b_dec_p = jnp.pad(b_dec, ((0, 0), (0, d_out_p - d_out)))

    dims = dict(d_in=int(d_in), enc_out=int(enc_out), latent=int(latent),
                d_out=int(d_out), enc_out_p=int(enc_out_p),
                latent_p=int(latent_p), d_out_p=int(d_out_p))
    weights = tuple(jax.device_put(w) for w in
                    (w_enc_p, b_enc_p, w_head, b_head, w_dec_p, b_dec_p))
    return weights, dims


# --------------------------------------------------------------------------
# Kernel
# --------------------------------------------------------------------------
def _vae_kernel(state_ref, w_enc_ref, b_enc_ref,
                w_head_ref, b_head_ref,
                w_dec_ref, b_dec_ref,
                eps_ref, out_ref, *, latent, latent_p):
    cd = w_enc_ref.dtype

    # encoder: h = tanh(state @ We + be); MXU matmul (f32 accumulate),
    # tanh in f32.  Padded enc_out columns come out exactly 0 (zero W/b).
    h = jnp.tanh(
        jnp.dot(state_ref[...].astype(cd), w_enc_ref[...],
                preferred_element_type=jnp.float32) + b_enc_ref[...])

    # fused mu / log_sigma head: ONE MXU matmul over [ Wmu|pad | Wls|pad ];
    # the split below is a free 128-aligned slice.
    head = jnp.dot(h.astype(cd), w_head_ref[...],
                   preferred_element_type=jnp.float32) + b_head_ref[...]
    mu = head[:, :latent_p]            # [tile_b, latent_p], pad cols are 0
    log_sigma = head[:, latent_p:]     # [tile_b, latent_p]

    # reparameterization: z = mu + exp(log_sigma) * eps (EUP exp, VPU mul).
    # exp / mul only touch the real `latent` columns; padded z columns stay
    # 0 and hit zero rows of w_dec, so the decoder result is exact.
    noise = jnp.exp(log_sigma[:, :latent]) * eps_ref[...].astype(jnp.float32)
    if latent != latent_p:
        noise = jnp.concatenate(
            [noise, jnp.zeros((noise.shape[0], latent_p - latent),
                              jnp.float32)], axis=-1)
    z = mu + noise

    # decoder: out = z @ Wd + bd, lane-dense (d_out padded to 128) store.
    out_ref[...] = (jnp.dot(z.astype(cd), w_dec_ref[...],
                            preferred_element_type=jnp.float32)
                    + b_dec_ref[...]).astype(out_ref.dtype)


# --------------------------------------------------------------------------
# Wrapper (hot path: a single pallas_call, no weight repacking)
# --------------------------------------------------------------------------
def vae_forward(state, packed, eps, *, tile_b=None, out_dtype=None):
    """Fused VAE forward.  state: [B, d_in], eps: [B, latent] (kept f32)."""
    (w_enc, b_enc, w_head, b_head, w_dec, b_dec), dims = packed
    B, d_in = state.shape
    assert d_in == dims["d_in"]
    latent, latent_p = dims["latent"], dims["latent_p"]
    d_out, d_out_p = dims["d_out"], dims["d_out_p"]
    cd = w_enc.dtype
    if out_dtype is None:
        out_dtype = cd  # bf16 writeback on the fast path

    eps_f = eps if eps.dtype == jnp.float32 else eps.astype(jnp.float32)

    # ---- batch tiling: avoid per-call pads whenever tile_b divides B ------
    if tile_b is None:
        tile_b = _choose_tile_b(B)
    tile_b = int(tile_b)
    if B % tile_b == 0:
        B_p, state_p, eps_p = B, state, eps_f
    else:
        # Rare fallback: zero-pad the ragged tail (rows sliced off below).
        B_p = _round_up(B, tile_b)
        state_p = jnp.pad(state, ((0, B_p - B), (0, 0)))
        eps_p = jnp.pad(eps_f, ((0, B_p - B), (0, 0)))
    grid = (B_p // tile_b,)
    semantics = ("parallel",) if grid[0] > 1 else ("arbitrary",)

    def const_spec(arr):  # grid-invariant resident weight / bias
        return pl.BlockSpec(arr.shape, lambda i: (0, 0))

    out_padded = pl.pallas_call(
        functools.partial(_vae_kernel, latent=latent, latent_p=latent_p),
        out_shape=jax.ShapeDtypeStruct((B_p, d_out_p), out_dtype),
        grid_spec=pltpu.PrefetchScalarGridSpec(
            num_scalar_prefetch=0,
            grid=grid,
            in_specs=[
                pl.BlockSpec((tile_b, d_in), lambda i: (i, 0)),    # state
                const_spec(w_enc), const_spec(b_enc),              # encoder
                const_spec(w_head), const_spec(b_head),            # fused head
                const_spec(w_dec), const_spec(b_dec),              # decoder
                pl.BlockSpec((tile_b, latent), lambda i: (i, 0)),  # eps (f32)
            ],
            out_specs=pl.BlockSpec((tile_b, d_out_p), lambda i: (i, 0)),
        ),
        compiler_params=pltpu.CompilerParams(dimension_semantics=semantics),
    )(state_p, w_enc, b_enc, w_head, b_head, w_dec, b_dec, eps_p)

    return out_padded[:B, :d_out]


# --------------------------------------------------------------------------
# Pure-JAX reference with the same dtype policy as the kernel
# --------------------------------------------------------------------------
def vae_reference(state, params, eps, *, compute_dtype=jnp.bfloat16,
                  out_dtype=None):
    (w_enc, b_enc, w_mu, b_mu, w_ls, b_ls, w_dec, b_dec) = params
    cd = compute_dtype
    if out_dtype is None:
        out_dtype = cd
    h = jnp.tanh(jnp.dot(state.astype(cd), w_enc.astype(cd),
                         preferred_element_type=jnp.float32) + b_enc)
    mu = jnp.dot(h.astype(cd), w_mu.astype(cd),
                 preferred_element_type=jnp.float32) + b_mu
    ls = jnp.dot(h.astype(cd), w_ls.astype(cd),
                 preferred_element_type=jnp.float32) + b_ls
    z = mu + jnp.exp(ls) * eps.astype(jnp.float32)
    out = jnp.dot(z.astype(cd), w_dec.astype(cd),
                  preferred_element_type=jnp.float32) + b_dec
    return out.astype(out_dtype)


def init_params(key, d_in, enc_out_dim, dec_in_dim, d_out):
    """Torch-style uniform fan-in Linear init; weights stored [in, out]."""
    def linear(k, fan_in, fan_out):
        kw, kb = jax.random.split(k)
        bound = 1.0 / jnp.sqrt(fan_in)
        w = jax.random.uniform(kw, (fan_in, fan_out), jnp.float32, -bound, bound)
        b = jax.random.uniform(kb, (1, fan_out), jnp.float32, -bound, bound)
        return w, b

    k1, k2, k3, k4 = jax.random.split(key, 4)
    w_enc, b_enc = linear(k1, d_in, enc_out_dim)        # encoder
    w_mu, b_mu = linear(k2, enc_out_dim, dec_in_dim)    # _enc_mu
    w_ls, b_ls = linear(k3, enc_out_dim, dec_in_dim)    # _enc_log_sigma
    w_dec, b_dec = linear(k4, dec_in_dim, d_out)        # decoder
    return (w_enc, b_enc, w_mu, b_mu, w_ls, b_ls, w_dec, b_dec)


if __name__ == "__main__":
    # Small shapes: batch=16 (single grid step, no batch pad), state dim=32,
    # encoder output=64, latent=16, decoder output=32.
    B, D_IN, ENC_OUT, LATENT, D_OUT = 16, 32, 64, 16, 32

    key = jax.random.PRNGKey(0)
    k_params, k_state, k_eps = jax.random.split(key, 3)

    params = init_params(k_params, D_IN, ENC_OUT, LATENT, D_OUT)
    state = jax.random.normal(k_state, (B, D_IN), jnp.float32)
    # std_z ~ N(0, 1): sampled outside the kernel (matches the torch
    # module's non-grad numpy draw), deterministic here via PRNGKey.
    eps = jax.random.normal(k_eps, (B, LATENT), jnp.float32)

    # ---- strict semantic check: f32 compute path vs pure-f32 reference ----
    packed_f32 = pack_params(params, compute_dtype=jnp.float32)
    out_f32 = jax.block_until_ready(
        vae_forward(state, packed_f32, eps, out_dtype=jnp.float32))
    ref_f32 = vae_reference(state, params, eps, compute_dtype=jnp.float32,
                            out_dtype=jnp.float32)
    assert out_f32.shape == (B, D_OUT)
    assert jnp.allclose(out_f32, ref_f32, atol=1e-4, rtol=1e-4), \
        "f32 mismatch vs reference"

    # ---- default fast path: bf16 matmuls / f32 accum / bf16 writeback -----
    packed_bf16 = pack_params(params)            # one-time prepack
    out_bf16 = jax.block_until_ready(vae_forward(state, packed_bf16, eps))
    ref_bf16 = vae_reference(state, params, eps)
    assert out_bf16.shape == (B, D_OUT)
    assert out_bf16.dtype == jnp.bfloat16
    assert jnp.allclose(out_bf16.astype(jnp.float32),
                        ref_bf16.astype(jnp.float32),
                        atol=2e-2, rtol=2e-2), "bf16 mismatch vs reference"

    print("KERNEL_OK")
</pallas_src>

<mosaic_0001>
module attributes {stable_mosaic.version = 11 : i64} {
  func.func @_vae_kernel(%arg0: i32, %arg1: memref<16x32xf32, #tpu.memory_space<vmem>>, %arg2: memref<32x128xf32, #tpu.memory_space<vmem>>, %arg3: memref<1x128xf32, #tpu.memory_space<vmem>>, %arg4: memref<128x256xf32, #tpu.memory_space<vmem>>, %arg5: memref<1x256xf32, #tpu.memory_space<vmem>>, %arg6: memref<128x128xf32, #tpu.memory_space<vmem>>, %arg7: memref<1x128xf32, #tpu.memory_space<vmem>>, %arg8: memref<16x16xf32, #tpu.memory_space<vmem>>, %arg9: memref<16x128xf32, #tpu.memory_space<vmem>>) attributes {dimension_semantics = [#tpu.dimension_semantics<arbitrary>], iteration_bounds = array<i64: 1>, scalar_prefetch = 0 : i64, scratch_operands = 0 : i64, tpu.core_type = #tpu.core_type<tc>, window_params = [{transform_indices = @transform_0, window_bounds = array<i64: 16, 32>}, {pipeline_mode = #tpu.pipeline_mode<synchronous>, transform_indices = @transform_1, window_bounds = array<i64: 32, 128>}, {pipeline_mode = #tpu.pipeline_mode<synchronous>, transform_indices = @transform_2, window_bounds = array<i64: 1, 128>}, {pipeline_mode = #tpu.pipeline_mode<synchronous>, transform_indices = @transform_3, window_bounds = array<i64: 128, 256>}, {pipeline_mode = #tpu.pipeline_mode<synchronous>, transform_indices = @transform_4, window_bounds = array<i64: 1, 256>}, {pipeline_mode = #tpu.pipeline_mode<synchronous>, transform_indices = @transform_5, window_bounds = array<i64: 128, 128>}, {pipeline_mode = #tpu.pipeline_mode<synchronous>, transform_indices = @transform_6, window_bounds = array<i64: 1, 128>}, {transform_indices = @transform_7, window_bounds = array<i64: 16, 16>}, {transform_indices = @transform_8, window_bounds = array<i64: 16, 128>}]} {
    %c0 = arith.constant 0 : index
    %c0_0 = arith.constant 0 : index
    %0 = vector.load %arg1[%c0, %c0_0] : memref<16x32xf32, #tpu.memory_space<vmem>>, vector<16x32xf32>
    %c0_1 = arith.constant 0 : index
    %c0_2 = arith.constant 0 : index
    %1 = vector.load %arg2[%c0_1, %c0_2] : memref<32x128xf32, #tpu.memory_space<vmem>>, vector<32x128xf32>
    %cst = arith.constant dense<0.000000e+00> : vector<16x128xf32>
    %2 = tpu.matmul %0, %1, %cst {dimension_numbers = #tpu.dot_dimension_numbers<[1], [0], [0], [1], [0, 0, 1, 1], [], []>} : vector<16x32xf32>, vector<32x128xf32>, vector<16x128xf32> -> vector<16x128xf32>
    %c0_3 = arith.constant 0 : index
    %c0_4 = arith.constant 0 : index
    %3 = vector.load %arg3[%c0_3, %c0_4] : memref<1x128xf32, #tpu.memory_space<vmem>>, vector<1x128xf32>
    %4 = vector.broadcast %3 : vector<1x128xf32> to vector<16x128xf32>
    %5 = arith.addf %2, %4 : vector<16x128xf32>
    %6 = math.tanh %5 : vector<16x128xf32>
    %c0_5 = arith.constant 0 : index
    %c0_6 = arith.constant 0 : index
    %7 = vector.load %arg4[%c0_5, %c0_6] : memref<128x256xf32, #tpu.memory_space<vmem>>, vector<128x256xf32>
    %cst_7 = arith.constant dense<0.000000e+00> : vector<16x256xf32>
    %8 = tpu.matmul %6, %7, %cst_7 {dimension_numbers = #tpu.dot_dimension_numbers<[1], [0], [0], [1], [0, 0, 1, 1], [], []>} : vector<16x128xf32>, vector<128x256xf32>, vector<16x256xf32> -> vector<16x256xf32>
    %c0_8 = arith.constant 0 : index
    %c0_9 = arith.constant 0 : index
    %9 = vector.load %arg5[%c0_8, %c0_9] : memref<1x256xf32, #tpu.memory_space<vmem>>, vector<1x256xf32>
    %10 = vector.broadcast %9 : vector<1x256xf32> to vector<16x256xf32>
    %11 = arith.addf %8, %10 : vector<16x256xf32>
    %12 = vector.extract_strided_slice %11 {offsets = [0, 0], sizes = [16, 128], strides = [1, 1]} : vector<16x256xf32> to vector<16x128xf32>
    %13 = vector.extract_strided_slice %11 {offsets = [0, 128], sizes = [16, 128], strides = [1, 1]} : vector<16x256xf32> to vector<16x128xf32>
    %14 = vector.extract_strided_slice %13 {offsets = [0, 0], sizes = [16, 16], strides = [1, 1]} : vector<16x128xf32> to vector<16x16xf32>
    %15 = math.exp %14 : vector<16x16xf32>
    %c0_10 = arith.constant 0 : index
    %c0_11 = arith.constant 0 : index
    %16 = vector.load %arg8[%c0_10, %c0_11] : memref<16x16xf32, #tpu.memory_space<vmem>>, vector<16x16xf32>
    %17 = arith.mulf %15, %16 : vector<16x16xf32>
    %cst_12 = arith.constant 0.000000e+00 : f32
    %18 = vector.broadcast %cst_12 : f32 to vector<16x112xf32>
    %19 = tpu.concatenate %17, %18 in 1 : vector<16x16xf32>, vector<16x112xf32> -> vector<16x128xf32>
    %20 = arith.addf %12, %19 : vector<16x128xf32>
    %c0_13 = arith.constant 0 : index
    %c0_14 = arith.constant 0 : index
    %21 = vector.load %arg6[%c0_13, %c0_14] : memref<128x128xf32, #tpu.memory_space<vmem>>, vector<128x128xf32>
    %cst_15 = arith.constant dense<0.000000e+00> : vector<16x128xf32>
    %22 = tpu.matmul %20, %21, %cst_15 {dimension_numbers = #tpu.dot_dimension_numbers<[1], [0], [0], [1], [0, 0, 1, 1], [], []>} : vector<16x128xf32>, vector<128x128xf32>, vector<16x128xf32> -> vector<16x128xf32>
    %c0_16 = arith.constant 0 : index
    %c0_17 = arith.constant 0 : index
    %23 = vector.load %arg7[%c0_16, %c0_17] : memref<1x128xf32, #tpu.memory_space<vmem>>, vector<1x128xf32>
    %24 = vector.broadcast %23 : vector<1x128xf32> to vector<16x128xf32>
    %25 = arith.addf %22, %24 : vector<16x128xf32>
    %c0_18 = arith.constant 0 : index
    %c0_19 = arith.constant 0 : index
    %26 = vector.load %arg9[%c0_18, %c0_19] : memref<16x128xf32, #tpu.memory_space<vmem>>, vector<16x128xf32>
    tpu.vector_store %arg9[%c0_18, %c0_19], %25 {strides = array<i32>} : memref<16x128xf32, #tpu.memory_space<vmem>>, vector<16x128xf32>,
    return
  }
  func.func @transform_0(%arg0: i32) -> (i32, i32) {
    %c0_i32 = arith.constant 0 : i32
    %c0_i32_0 = arith.constant 0 : i32
    return %arg0, %c0_i32 : i32, i32
  }
  func.func @transform_1(%arg0: i32) -> (i32, i32) {
    %c0_i32 = arith.constant 0 : i32
    %c0_i32_0 = arith.constant 0 : i32
    %c0_i32_1 = arith.constant 0 : i32
    return %c0_i32, %c0_i32_0 : i32, i32
  }
  func.func @transform_2(%arg0: i32) -> (i32, i32) {
    %c0_i32 = arith.constant 0 : i32
    %c0_i32_0 = arith.constant 0 : i32
    %c0_i32_1 = arith.constant 0 : i32
    return %c0_i32, %c0_i32_0 : i32, i32
  }
  func.func @transform_3(%arg0: i32) -> (i32, i32) {
    %c0_i32 = arith.constant 0 : i32
    %c0_i32_0 = arith.constant 0 : i32
    %c0_i32_1 = arith.constant 0 : i32
    return %c0_i32, %c0_i32_0 : i32, i32
  }
  func.func @transform_4(%arg0: i32) -> (i32, i32) {
    %c0_i32 = arith.constant 0 : i32
    %c0_i32_0 = arith.constant 0 : i32
    %c0_i32_1 = arith.constant 0 : i32
    return %c0_i32, %c0_i32_0 : i32, i32
  }
  func.func @transform_5(%arg0: i32) -> (i32, i32) {
    %c0_i32 = arith.constant 0 : i32
    %c0_i32_0 = arith.constant 0 : i32
    %c0_i32_1 = arith.constant 0 : i32
    return %c0_i32, %c0_i32_0 : i32, i32
  }
  func.func @transform_6(%arg0: i32) -> (i32, i32) {
    %c0_i32 = arith.constant 0 : i32
    %c0_i32_0 = arith.constant 0 : i32
    %c0_i32_1 = arith.constant 0 : i32
    return %c0_i32, %c0_i32_0 : i32, i32
  }
  func.func @transform_7(%arg0: i32) -> (i32, i32) {
    %c0_i32 = arith.constant 0 : i32
    %c0_i32_0 = arith.constant 0 : i32
    return %arg0, %c0_i32 : i32, i32
  }
  func.func @transform_8(%arg0: i32) -> (i32, i32) {
    %c0_i32 = arith.constant 0 : i32
    %c0_i32_0 = arith.constant 0 : i32
    return %arg0, %c0_i32 : i32, i32
  }
}

</mosaic_0001>

<llo_original>
// kernel: tpu_custom_call.1
$region0: #{tpu_custom_call.1}
  #allocation0 [shape = 'u32[]', space=smem, size = 0x4, offset = 0x4, fixed_abs, tag = 'smem constant byte address 0x4 - core index']
  #allocation1 [shape = 'u32[144,128]{1,0:T(1,128)}', space=vmem, size = 0x12000, scoped, tag = 'internal scratch']
  %s0 = inlined_call_operand.hbm [shape: f32[16,32], index: 0, kind: input, shape index: {}]
  %s1 = inlined_call_operand.hbm [shape: f32[32,128], index: 1, kind: input, shape index: {}]
  %s2 = inlined_call_operand.vmem [shape: f32[1,128], index: 2, kind: input, shape index: {}]
  %s3 = inlined_call_operand.hbm [shape: f32[128,256], index: 3, kind: input, shape index: {}]
  %s4 = inlined_call_operand.vmem [shape: f32[1,256], index: 4, kind: input, shape index: {}]
  %s5 = inlined_call_operand.hbm [shape: f32[128,128], index: 5, kind: input, shape index: {}]
  %s6 = inlined_call_operand.vmem [shape: f32[1,128], index: 6, kind: input, shape index: {}]
  %s7 = inlined_call_operand.vmem [shape: f32[16,16], index: 7, kind: input, shape index: {}]
  %s8 = inlined_call_operand.hbm [shape: f32[16,128], index: 8, kind: output, shape index: {}]
  %s9 = sld [smem:[#allocation0]]
  $region58: #{tpu_custom_call.1} parent=0
    _
  %s11 = ssub.s32 1, %s9
  %s12 = scalar_select 0, %s11, %s9
  $region1: #{tpu_custom_call.1} parent=0
    #allocation2 [shape = 'u8[8192]{0}', space=vmem, size = 0x2000, scoped, tag = 'input window, operand 0, single buffered']
    #allocation3 [shape = 's32[1]{0}', space=sflag, size = 0x4, scoped, tag = 'scoped memory for tpu_custom_call.1']
    #allocation4 [shape = 's32[1]{0}', space=sflag, size = 0x4, scoped, tag = 'scoped memory for tpu_custom_call.1']
    #allocation5 [shape = 'u8[16384]{0}', space=vmem, size = 0x4000, scoped, tag = 'input window, operand 1, single buffered']
    #allocation6 [shape = 's32[1]{0}', space=sflag, size = 0x4, scoped, tag = 'scoped memory for tpu_custom_call.1']
    #allocation7 [shape = 'u8[131072]{0}', space=vmem, size = 0x20000, scoped, tag = 'input window, operand 3, single buffered']
    #allocation8 [shape = 'u8[65536]{0}', space=vmem, size = 0x10000, scoped, tag = 'input window, operand 5, single buffered']
    #allocation9 [shape = 's32[1]{0}', space=sflag, size = 0x4, scoped, tag = 'scoped memory for tpu_custom_call.1']
    #allocation10 [shape = 'u8[8192]{0}', space=vmem, size = 0x2000, scoped, tag = 'output window, operand 0, single buffered']
    %13 = vsyncpa [#allocation3], 0
    %14 = vsyncpa [#allocation6], 0
    %15 = vsyncpa [#allocation9], 0
    %16 = vsyncpa [#allocation4], 0
    // Predicated region
    $region2: #{tpu_custom_call.1} parent=1 // pred_check
      _
    $region3: #{tpu_custom_call.1} parent=1 // pred_check_branch
      %18 = sbr.rel (0) target = $region5
    $region4: #{tpu_custom_call.1} parent=1 // pred_region
      %s20 = ssub.s32 256, 256
      %21 = vsyncadd [#allocation3], %s20
      %s22 = sshll.u32 [#allocation2], 4
      %s23 = int_to_ptr.vmem [resolvable:$true] %s22
      %28 = dma.hbm_to_vmem [thread:$0]  %s0, 256, %s23, [#allocation3], 128, 128, 8
    $region5: #{tpu_custom_call.1} parent=1 // pred_fallthru
      _
    // Predicated region
    $region6: #{tpu_custom_call.1} parent=1 // pred_check
      _
    $region7: #{tpu_custom_call.1} parent=1 // pred_check_branch
      %30 = sbr.rel (0) target = $region9
    $region8: #{tpu_custom_call.1} parent=1 // pred_region
      %s32 = ssub.s32 512, 512
      %33 = vsyncadd [#allocation6], %s32
      %s34 = sshll.u32 [#allocation5], 4
      %s35 = int_to_ptr.vmem [resolvable:$true] %s34
      %40 = dma.hbm_to_vmem [thread:$0]  %s1, 512, %s35, [#allocation6], 128, 128, 8
    $region9: #{tpu_custom_call.1} parent=1 // pred_fallthru
      _
    // Predicated region
    $region10: #{tpu_custom_call.1} parent=1 // pred_check
      _
    $region11: #{tpu_custom_call.1} parent=1 // pred_check_branch
      %42 = sbr.rel (0) target = $region13
    $region12: #{tpu_custom_call.1} parent=1 // pred_region
      _
    $region13: #{tpu_custom_call.1} parent=1 // pred_fallthru
      _
    // Predicated region
    $region14: #{tpu_custom_call.1} parent=1 // pred_check
      _
    $region15: #{tpu_custom_call.1} parent=1 // pred_check_branch
      %44 = sbr.rel (0) target = $region17
    $region16: #{tpu_custom_call.1} parent=1 // pred_region
      %s46 = ssub.s32 4096, 4096
      %47 = vsyncadd [#allocation6], %s46
      %s48 = sshll.u32 [#allocation7], 4
      %s49 = int_to_ptr.vmem [resolvable:$true] %s48
      %54 = dma.hbm_to_vmem [thread:$0]  %s3, 4096, %s49, [#allocation6], 256, 256, 16
    $region17: #{tpu_custom_call.1} parent=1 // pred_fallthru
      _
    // Predicated region
    $region18: #{tpu_custom_call.1} parent=1 // pred_check
      _
    $region19: #{tpu_custom_call.1} parent=1 // pred_check_branch
      %56 = sbr.rel (0) target = $region21
    $region20: #{tpu_custom_call.1} parent=1 // pred_region
      _
    $region21: #{tpu_custom_call.1} parent=1 // pred_fallthru
      _
    // Predicated region
    $region22: #{tpu_custom_call.1} parent=1 // pred_check
      _
    $region23: #{tpu_custom_call.1} parent=1 // pred_check_branch
      %58 = sbr.rel (0) target = $region25
    $region24: #{tpu_custom_call.1} parent=1 // pred_region
      %s60 = ssub.s32 2048, 2048
      %61 = vsyncadd [#allocation9], %s60
      %s62 = sshll.u32 [#allocation8], 4
      %s63 = int_to_ptr.vmem [resolvable:$true] %s62
      %68 = dma.hbm_to_vmem [thread:$0]  %s5, 2048, %s63, [#allocation9], 128, 128, 8
    $region25: #{tpu_custom_call.1} parent=1 // pred_fallthru
      _
    // Predicated region
    $region26: #{tpu_custom_call.1} parent=1 // pred_check
      _
    $region27: #{tpu_custom_call.1} parent=1 // pred_check_branch
      %70 = sbr.rel (0) target = $region29
    $region28: #{tpu_custom_call.1} parent=1 // pred_region
      _
    $region29: #{tpu_custom_call.1} parent=1 // pred_fallthru
      _
    // Predicated region
    $region30: #{tpu_custom_call.1} parent=1 // pred_check
      _
    $region31: #{tpu_custom_call.1} parent=1 // pred_check_branch
      %72 = sbr.rel (0) target = $region33
    $region32: #{tpu_custom_call.1} parent=1 // pred_region
      _
    $region33: #{tpu_custom_call.1} parent=1 // pred_fallthru
      _
    // Predicated region
    $region34: #{tpu_custom_call.1} parent=1 // pred_check
      _
    $region35: #{tpu_custom_call.1} parent=1 // pred_check_branch
      %74 = sbr.rel (0) target = $region37
    $region36: #{tpu_custom_call.1} parent=1 // pred_region
      %75 = dma.done [#allocation3], 256
    $region37: #{tpu_custom_call.1} parent=1 // pred_fallthru
      _
    // Predicated region
    $region38: #{tpu_custom_call.1} parent=1 // pred_check
      _
    $region39: #{tpu_custom_call.1} parent=1 // pred_check_branch
      %77 = sbr.rel (0) target = $region41
    $region40: #{tpu_custom_call.1} parent=1 // pred_region
      %78 = dma.done [#allocation6], 512
    $region41: #{tpu_custom_call.1} parent=1 // pred_fallthru
      _
    // Predicated region
    $region42: #{tpu_custom_call.1} parent=1 // pred_check
      _
    $region43: #{tpu_custom_call.1} parent=1 // pred_check_branch
      %80 = sbr.rel (0) target = $region45
    $region44: #{tpu_custom_call.1} parent=1 // pred_region
      %81 = dma.done [#allocation6], 4096
    $region45: #{tpu_custom_call.1} parent=1 // pred_fallthru
      _
    // Predicated region
    $region46: #{tpu_custom_call.1} parent=1 // pred_check
      _
    $region47: #{tpu_custom_call.1} parent=1 // pred_check_branch
      %83 = sbr.rel (0) target = $region49
    $region48: #{tpu_custom_call.1} parent=1 // pred_region
      %84 = dma.done [#allocation9], 2048
    $region49: #{tpu_custom_call.1} parent=1 // pred_fallthru
      _
    %v85 = vld [vmem:[#allocation2] sm:$0xff]
    %v86 = vld [vmem:[#allocation2 + $0x8] sm:$0xff]
    %v87 = vld [vmem:[#allocation5] sm:$0xff]
    %v88 = vld [vmem:[#allocation5 + $0x8] sm:$0xff]
    %v89 = vld [vmem:[#allocation5 + $0x10] sm:$0xff]
    %v90 = vld [vmem:[#allocation5 + $0x18] sm:$0xff]
    %v91 = vld [vmem:[%s2] sm:$0x1]
    %v93 = vlaneseq
    %v94 = vshrl.u32 %v93, 7
    %v95 = vsub.s32 0, %v94
    %v96 = vrot.slane %v91, %v95
    %vm98 = vcmask 261120
    %v100 = vsel %vm98, %v85, 0
    %v103 = vsel %vm98, %v86, 0
    %105 = vmatprep.subr.mxu0 0.0
    %106 = vmatpush1.msra.mxu0 %v87
    %107 = vmatprep.subr.mxu0 0.0
    %108 = vmatpush1.msra.mxu0 %v88
    %109 = vmatprep.subr.mxu0 0.0
    %110 = vmatpush1.msra.mxu0 %v89
    %111 = vmatprep.subr.mxu0 0.0
    %112 = vmatpush1.msra.mxu0 %v90
    %113 = vmatprep.subr.mxu0 0.0
    %114 = vmatpush1.msra.mxu0 0.0
    %115 = vmatprep.subr.mxu0 0.0
    %116 = vmatpush1.msra.mxu0 0.0
    %117 = vmatprep.subr.mxu0 0.0
    %118 = vmatpush1.msra.mxu0 0.0
    %119 = vmatprep.subr.mxu0 0.0
    %120 = vmatpush1.msra.mxu0 0.0
    %121 = vmatprep.subr.mxu0 0.0
    %122 = vmatpush1.msra.mxu0 0.0
    %123 = vmatprep.subr.mxu0 0.0
    %124 = vmatpush1.msra.mxu0 0.0
    %125 = vmatprep.subr.mxu0 0.0
    %126 = vmatpush1.msra.mxu0 0.0
    %127 = vmatprep.subr.mxu0 0.0
    %128 = vmatpush1.msra.mxu0 0.0
    %129 = vmatprep.subr.mxu0 0.0
    %130 = vmatpush1.msra.mxu0 0.0
    %131 = vmatprep.subr.mxu0 0.0
    %132 = vmatpush1.msra.mxu0 0.0
    %133 = vmatprep.subr.mxu0 0.0
    %134 = vmatpush1.msra.mxu0 0.0
    %135 = vmatprep.subr.mxu0 0.0
    %136 = vmatpush1.msra.mxu0 0.0
    %137 = vmatprep.subr.mxu0 0.0
    %138 = vmatpush1.msra.mxu0 0.0
    %139 = vmatprep.subr.mxu0 0.0
    %140 = vmatpush1.msra.mxu0 0.0
    %141 = vmatprep.subr.mxu0 0.0
    %142 = vmatpush1.msra.mxu0 0.0
    %143 = vmatprep.subr.mxu0 0.0
    %144 = vmatpush1.msra.mxu0 0.0
    %145 = vmatprep.subr.mxu0 0.0
    %146 = vmatpush1.msra.mxu0 0.0
    %147 = vmatprep.subr.mxu0 0.0
    %148 = vmatpush1.msra.mxu0 0.0
    %149 = vmatprep.subr.mxu0 0.0
    %150 = vmatpush1.msra.mxu0 0.0
    %151 = vmatprep.subr.mxu0 0.0
    %152 = vmatpush1.msra.mxu0 0.0
    %153 = vmatprep.subr.mxu0 0.0
    %154 = vmatpush1.msra.mxu0 0.0
    %155 = vmatprep.subr.mxu0 0.0
    %156 = vmatpush1.msra.mxu0 0.0
    %157 = vmatprep.subr.mxu0 0.0
    %158 = vmatpush1.msra.mxu0 0.0
    %159 = vmatprep.subr.mxu0 0.0
    %160 = vmatpush1.msra.mxu0 0.0
    %161 = vmatprep.subr.mxu0 0.0
    %162 = vmatpush1.msra.mxu0 0.0
    %163 = vmatprep.subr.mxu0 0.0
    %164 = vmatpush1.msra.mxu0 0.0
    %165 = vmatprep.subr.mxu0 0.0
    %166 = vmatpush1.msra.mxu0 0.0
    %167 = vmatprep.subr.mxu0 0.0
    %168 = vmatpush1.msra.mxu0 0.0
    %169 = vmatprep.mubr.f32.mxu0 0.0
    %170 = vmatmul.mubr.f32.gmra.mrb[0].mxu0 %v100
    %v171 = vpop.f32.mrb[0].mxu0
    %v172 = vadd.f32 %v96, %v171
    %v173 = vpop.f32.mrb[0].mxu0
    %174 = vmatprep.mubr.f32.mxu0 0.0
    %175 = vmatmul.mubr.f32.gmra.mrb[0].mxu0 %v103
    %v176 = vpop.f32.mrb[0].mxu0
    %v177 = vadd.f32 %v96, %v176
    %v178 = vpop.f32.mrb[0].mxu0
    %179 = vdwg.mxu0
    %v180 = vtanh.pop %v172
    %v181 = vtanh.pop %v177
    %v182 = vld [vmem:[#allocation7] sm:$0xff]
    %v183 = vld [vmem:[#allocation7 + $0x8] sm:$0xff]
    %v184 = vld [vmem:[#allocation7 + $0x10] sm:$0xff]
    %v185 = vld [vmem:[#allocation7 + $0x18] sm:$0xff]
    %v186 = vld [vmem:[#allocation7 + $0x20] sm:$0xff]
    %v187 = vld [vmem:[#allocation7 + $0x28] sm:$0xff]
    %v188 = vld [vmem:[#allocation7 + $0x30] sm:$0xff]
    %v189 = vld [vmem:[#allocation7 + $0x38] sm:$0xff]
    %v190 = vld [vmem:[#allocation7 + $0x40] sm:$0xff]
    %v191 = vld [vmem:[#allocation7 + $0x48] sm:$0xff]
    %v192 = vld [vmem:[#allocation7 + $0x50] sm:$0xff]
    %v193 = vld [vmem:[#allocation7 + $0x58] sm:$0xff]
    %v194 = vld [vmem:[#allocation7 + $0x60] sm:$0xff]
    %v195 = vld [vmem:[#allocation7 + $0x68] sm:$0xff]
    %v196 = vld [vmem:[#allocation7 + $0x70] sm:$0xff]
    %v197 = vld [vmem:[#allocation7 + $0x78] sm:$0xff]
    %v198 = vld [vmem:[#allocation7 + $0x80] sm:$0xff]
    %v199 = vld [vmem:[#allocation7 + $0x88] sm:$0xff]
    %v200 = vld [vmem:[#allocation7 + $0x90] sm:$0xff]
    %v201 = vld [vmem:[#allocation7 + $0x98] sm:$0xff]
    %v202 = vld [vmem:[#allocation7 + $0xa0] sm:$0xff]
    %v203 = vld [vmem:[#allocation7 + $0xa8] sm:$0xff]
    %v204 = vld [vmem:[#allocation7 + $0xb0] sm:$0xff]
    %v205 = vld [vmem:[#allocation7 + $0xb8] sm:$0xff]
    %v206 = vld [vmem:[#allocation7 + $0xc0] sm:$0xff]
    %v207 = vld [vmem:[#allocation7 + $0xc8] sm:$0xff]
    %v208 = vld [vmem:[#allocation7 + $0xd0] sm:$0xff]
    %v209 = vld [vmem:[#allocation7 + $0xd8] sm:$0xff]
    %v210 = vld [vmem:[#allocation7 + $0xe0] sm:$0xff]
    %v211 = vld [vmem:[#allocation7 + $0xe8] sm:$0xff]
    %v212 = vld [vmem:[#allocation7 + $0xf0] sm:$0xff]
    %v213 = vld [vmem:[#allocation7 + $0xf8] sm:$0xff]
    %v214 = vld [vmem:[%s4] sm:$0x3]
    %v216 = vlaneseq
    %v217 = vshrl.u32 %v216, 7
    %v218 = vsub.s32 0, %v217
    %v219 = vrot.slane %v214, %v218
    %v220 = vlaneseq
    %v221 = vshrl.u32 %v220, 7
    %v222 = vsub.s32 1, %v221
    %v223 = vrot.slane %v214, %v222
    %226 = vmatprep.subr.mxu0 %v183
    %227 = vmatpush1.msra.mxu0 %v182
    %228 = vmatprep.subr.mxu0 %v185
    %229 = vmatpush1.msra.mxu0 %v184
    %230 = vmatprep.subr.mxu0 %v187
    %231 = vmatpush1.msra.mxu0 %v186
    %232 = vmatprep.subr.mxu0 %v189
    %233 = vmatpush1.msra.mxu0 %v188
    %234 = vmatprep.subr.mxu0 %v191
    %235 = vmatpush1.msra.mxu0 %v190
    %236 = vmatprep.subr.mxu0 %v193
    %237 = vmatpush1.msra.mxu0 %v192
    %238 = vmatprep.subr.mxu0 %v195
    %239 = vmatpush1.msra.mxu0 %v194
    %240 = vmatprep.subr.mxu0 %v197
    %241 = vmatpush1.msra.mxu0 %v196
    %242 = vmatprep.subr.mxu0 %v199
    %243 = vmatpush1.msra.mxu0 %v198
    %244 = vmatprep.subr.mxu0 %v201
    %245 = vmatpush1.msra.mxu0 %v200
    %246 = vmatprep.subr.mxu0 %v203
    %247 = vmatpush1.msra.mxu0 %v202
    %248 = vmatprep.subr.mxu0 %v205
    %249 = vmatpush1.msra.mxu0 %v204
    %250 = vmatprep.subr.mxu0 %v207
    %251 = vmatpush1.msra.mxu0 %v206
    %252 = vmatprep.subr.mxu0 %v209
    %253 = vmatpush1.msra.mxu0 %v208
    %254 = vmatprep.subr.mxu0 %v211
    %255 = vmatpush1.msra.mxu0 %v210
    %256 = vmatprep.subr.mxu0 %v213
    %257 = vmatpush1.msra.mxu0 %v212
    %258 = vmatprep.subr.mxu0 0.0
    %259 = vmatpush1.msra.mxu0 0.0
    %260 = vmatprep.subr.mxu0 0.0
    %261 = vmatpush1.msra.mxu0 0.0
    %262 = vmatprep.subr.mxu0 0.0
    %263 = vmatpush1.msra.mxu0 0.0
    %264 = vmatprep.subr.mxu0 0.0
    %265 = vmatpush1.msra.mxu0 0.0
    %266 = vmatprep.subr.mxu0 0.0
    %267 = vmatpush1.msra.mxu0 0.0
    %268 = vmatprep.subr.mxu0 0.0
    %269 = vmatpush1.msra.mxu0 0.0
    %270 = vmatprep.subr.mxu0 0.0
    %271 = vmatpush1.msra.mxu0 0.0
    %272 = vmatprep.subr.mxu0 0.0
    %273 = vmatpush1.msra.mxu0 0.0
    %274 = vmatprep.subr.mxu0 0.0
    %275 = vmatpush1.msra.mxu0 0.0
    %276 = vmatprep.subr.mxu0 0.0
    %277 = vmatpush1.msra.mxu0 0.0
    %278 = vmatprep.subr.mxu0 0.0
    %279 = vmatpush1.msra.mxu0 0.0
    %280 = vmatprep.subr.mxu0 0.0
    %281 = vmatpush1.msra.mxu0 0.0
    %282 = vmatprep.subr.mxu0 0.0
    %283 = vmatpush1.msra.mxu0 0.0
    %284 = vmatprep.subr.mxu0 0.0
    %285 = vmatpush1.msra.mxu0 0.0
    %286 = vmatprep.subr.mxu0 0.0
    %287 = vmatpush1.msra.mxu0 0.0
    %288 = vmatprep.subr.mxu0 0.0
    %289 = vmatpush1.msra.mxu0 0.0
    %290 = vmatprep.mubr.f32.mxu0 0.0
    %291 = vmatmul.mubr.f32.gmra.mrb[0].mxu0 %v180
    %v292 = vpop.f32.mrb[0].mxu0
    %v293 = vadd.f32 %v219, %v292
    %v294 = vpop.f32.mrb[0].mxu0
    %v295 = vadd.f32 %v223, %v294
    %296 = vmatprep.mubr.f32.mxu0 0.0
    %297 = vmatmul.mubr.f32.gmra.mrb[0].mxu0 %v181
    %v298 = vpop.f32.mrb[0].mxu0
    %v299 = vadd.f32 %v219, %v298
    %v300 = vpop.f32.mrb[0].mxu0
    %v301 = vadd.f32 %v223, %v300
    %302 = vdwg.mxu0
    %v303 = vmul.f32 %v295, 1.442695
    %v304 = vpow.pop %v303
    %v305 = vmul.f32 %v301, 1.442695
    %v306 = vpow.pop %v305
    %v307 = vld [vmem:[%s7] sm:$0xff]
    %v308 = vld [vmem:[%s7 + $0x8] sm:$0xff]
    %v309 = vmul.f32 %v304, %v307
    %v310 = vmul.f32 %v306, %v308
    %vm311 = vcmask 130048
    %v312 = vsel %vm311, %v309, 0.0
    %v313 = vsel %vm311, %v310, 0.0
    %v314 = vadd.f32 %v293, %v312
    %v315 = vadd.f32 %v299, %v313
    %v316 = vld [vmem:[#allocation8] sm:$0xff]
    %v317 = vld [vmem:[#allocation8 + $0x8] sm:$0xff]
    %v318 = vld [vmem:[#allocation8 + $0x10] sm:$0xff]
    %v319 = vld [vmem:[#allocation8 + $0x18] sm:$0xff]
    %v320 = vld [vmem:[#allocation8 + $0x20] sm:$0xff]
    %v321 = vld [vmem:[#allocation8 + $0x28] sm:$0xff]
    %v322 = vld [vmem:[#allocation8 + $0x30] sm:$0xff]
    %v323 = vld [vmem:[#allocation8 + $0x38] sm:$0xff]
    %v324 = vld [vmem:[#allocation8 + $0x40] sm:$0xff]
    %v325 = vld [vmem:[#allocation8 + $0x48] sm:$0xff]
    %v326 = vld [vmem:[#allocation8 + $0x50] sm:$0xff]
    %v327 = vld [vmem:[#allocation8 + $0x58] sm:$0xff]
    %v328 = vld [vmem:[#allocation8 + $0x60] sm:$0xff]
    %v329 = vld [vmem:[#allocation8 + $0x68] sm:$0xff]
    %v330 = vld [vmem:[#allocation8 + $0x70] sm:$0xff]
    %v331 = vld [vmem:[#allocation8 + $0x78] sm:$0xff]
    %v332 = vld [vmem:[%s6] sm:$0x1]
    %v334 = vlaneseq
    %v335 = vshrl.u32 %v334, 7
    %v336 = vsub.s32 0, %v335
    %v337 = vrot.slane %v332, %v336
    %339 = vmatprep.subr.mxu0 0.0
    %340 = vmatpush1.msra.mxu0 %v316
    %341 = vmatprep.subr.mxu0 0.0
    %342 = vmatpush1.msra.mxu0 %v317
    %343 = vmatprep.subr.mxu0 0.0
    %344 = vmatpush1.msra.mxu0 %v318
    %345 = vmatprep.subr.mxu0 0.0
    %346 = vmatpush1.msra.mxu0 %v319
    %347 = vmatprep.subr.mxu0 0.0
    %348 = vmatpush1.msra.mxu0 %v320
    %349 = vmatprep.subr.mxu0 0.0
    %350 = vmatpush1.msra.mxu0 %v321
    %351 = vmatprep.subr.mxu0 0.0
    %352 = vmatpush1.msra.mxu0 %v322
    %353 = vmatprep.subr.mxu0 0.0
    %354 = vmatpush1.msra.mxu0 %v323
    %355 = vmatprep.subr.mxu0 0.0
    %356 = vmatpush1.msra.mxu0 %v324
    %357 = vmatprep.subr.mxu0 0.0
    %358 = vmatpush1.msra.mxu0 %v325
    %359 = vmatprep.subr.mxu0 0.0
    %360 = vmatpush1.msra.mxu0 %v326
    %361 = vmatprep.subr.mxu0 0.0
    %362 = vmatpush1.msra.mxu0 %v327
    %363 = vmatprep.subr.mxu0 0.0
    %364 = vmatpush1.msra.mxu0 %v328
    %365 = vmatprep.subr.mxu0 0.0
    %366 = vmatpush1.msra.mxu0 %v329
    %367 = vmatprep.subr.mxu0 0.0
    %368 = vmatpush1.msra.mxu0 %v330
    %369 = vmatprep.subr.mxu0 0.0
    %370 = vmatpush1.msra.mxu0 %v331
    %371 = vmatprep.subr.mxu0 0.0
    %372 = vmatpush1.msra.mxu0 0.0
    %373 = vmatprep.subr.mxu0 0.0
    %374 = vmatpush1.msra.mxu0 0.0
    %375 = vmatprep.subr.mxu0 0.0
    %376 = vmatpush1.msra.mxu0 0.0
    %377 = vmatprep.subr.mxu0 0.0
    %378 = vmatpush1.msra.mxu0 0.0
    %379 = vmatprep.subr.mxu0 0.0
    %380 = vmatpush1.msra.mxu0 0.0
    %381 = vmatprep.subr.mxu0 0.0
    %382 = vmatpush1.msra.mxu0 0.0
    %383 = vmatprep.subr.mxu0 0.0
    %384 = vmatpush1.msra.mxu0 0.0
    %385 = vmatprep.subr.mxu0 0.0
    %386 = vmatpush1.msra.mxu0 0.0
    %387 = vmatprep.subr.mxu0 0.0
    %388 = vmatpush1.msra.mxu0 0.0
    %389 = vmatprep.subr.mxu0 0.0
    %390 = vmatpush1.msra.mxu0 0.0
    %391 = vmatprep.subr.mxu0 0.0
    %392 = vmatpush1.msra.mxu0 0.0
    %393 = vmatprep.subr.mxu0 0.0
    %394 = vmatpush1.msra.mxu0 0.0
    %395 = vmatprep.subr.mxu0 0.0
    %396 = vmatpush1.msra.mxu0 0.0
    %397 = vmatprep.subr.mxu0 0.0
    %398 = vmatpush1.msra.mxu0 0.0
    %399 = vmatprep.subr.mxu0 0.0
    %400 = vmatpush1.msra.mxu0 0.0
    %401 = vmatprep.subr.mxu0 0.0
    %402 = vmatpush1.msra.mxu0 0.0
    %403 = vmatprep.mubr.f32.mxu0 0.0
    %404 = vmatmul.mubr.f32.gmra.mrb[0].mxu0 %v314
    %v405 = vpop.f32.mrb[0].mxu0
    %v406 = vadd.f32 %v337, %v405
    %v407 = vpop.f32.mrb[0].mxu0
    %408 = vmatprep.mubr.f32.mxu0 0.0
    %409 = vmatmul.mubr.f32.gmra.mrb[0].mxu0 %v315
    %v410 = vpop.f32.mrb[0].mxu0
    %v411 = vadd.f32 %v337, %v410
    %v412 = vpop.f32.mrb[0].mxu0
    %413 = vdwg.mxu0
    %414 = vst [vmem:[#allocation10] sm:$0xff] %v406
    %415 = vst [vmem:[#allocation10 + $0x8] sm:$0xff] %v411
    // Predicated region
    $region50: #{tpu_custom_call.1} parent=1 // pred_check
      _
    $region51: #{tpu_custom_call.1} parent=1 // pred_check_branch
      %417 = sbr.rel (0) target = $region53
    $region52: #{tpu_custom_call.1} parent=1 // pred_region
      %s419 = ssub.s32 256, 256
      %420 = vsyncadd [#allocation4], %s419
      %s421 = sshll.u32 [#allocation10], 4
      %s422 = int_to_ptr.vmem [resolvable:$true] %s421
      %427 = dma.vmem_to_hbm [thread:$0]  %s422, 256, %s8, [#allocation4], 128, 128, 8
    $region53: #{tpu_custom_call.1} parent=1 // pred_fallthru
      _
    // Predicated region
    $region54: #{tpu_custom_call.1} parent=1 // pred_check
      _
    $region55: #{tpu_custom_call.1} parent=1 // pred_check_branch
      %429 = sbr.rel (0) target = $region57
    $region56: #{tpu_custom_call.1} parent=1 // pred_region
      %430 = dma.done [#allocation4], 256
    $region57: #{tpu_custom_call.1} parent=1 // pred_fallthru
      _
    %431 = vsyncpa [#allocation3], 1
    %432 = vsyncpa [#allocation6], 1
    %433 = vsyncpa [#allocation9], 1
    %434 = vsyncpa [#allocation4], 1

</llo_original>
